<compile_context>
chip_gen: v7x
topology: tpu7x:2x2x1
jax: 0.10.0
libtpu: 0.0.40
codegen_flags: <defaults>
</compile_context>

<pallas_src>
import numpy as np
import jax
import jax.numpy as jnp
from jax import lax
from jax.experimental import pallas as pl
from jax.experimental.pallas import tpu as pltpu

# ---------------- config (small shapes consistent with the module) ----------
IMG_SIZE   = (16, 16)   # (H, W)
PATCH_SIZE = (4, 4)     # (ph, pw)
IN_CHANS   = 1
EMBED_DIM  = 32
MASK_RATIO = 0.5
FREQ_FIRST = True
LN_EPS     = 1e-6
BATCH      = 2

GRID_H = IMG_SIZE[0] // PATCH_SIZE[0]
GRID_W = IMG_SIZE[1] // PATCH_SIZE[1]
NUM_PATCHES = GRID_H * GRID_W                               # 16
PATCH_DIM = PATCH_SIZE[0] * PATCH_SIZE[1] * IN_CHANS        # 16

LANE = 128                       # padded lane width for both D and P
INV_SQRT2 = float(1.0 / np.sqrt(2.0))


# ---------------- fused Pallas kernel ----------------------------------------
def _ssast_fused_kernel(patch_ref, mask_ref, addp_ref, mtok_ref, wpe_ref,
                        g_ref, beta_ref, w1_ref, b1_ref, w2_ref, b2_ref,
                        out_ref):
    """Fused forward over all batches at once (batch folded into sublanes).

    patch_ref : (R, LANE)   raw conv patches (c,ph,pw order), lane-padded
    mask_ref  : (R, 1)      1.0 == masked (lane-broadcast inside)
    addp_ref  : (R, LANE)   conv bias + pos_embed[1:] tiled over batch, padded
    mtok_ref  : (1, LANE)   mask token (padded lanes 0)
    wpe_ref   : (LANE,LANE) conv weight flattened, padded rows/cols 0
    g/beta    : (1, LANE)   LayerNorm affine, padded lanes 0
    w1,b1,w2,b2 : padded pred head  (LANE,LANE)/(1,LANE)
    out_ref   : (R, LANE)   per-token predictions; real data in [:, :PATCH_DIM]
    """
    # -- patch embed (stride=kernel conv as matmul) + (bias+pos) + mask mix --
    e = jnp.dot(patch_ref[...], wpe_ref[...],
                preferred_element_type=jnp.float32)           # (R, LANE)
    t = e + addp_ref[...]
    # mask is exactly 0/1 -> select instead of lerp (frees VALU slots)
    xp = jnp.where(mask_ref[...] != 0.0, mtok_ref[...], t)    # (R, LANE)

    # -- encoder LayerNorm over the real EMBED_DIM features --
    # Padded lanes of xp are exactly zero, so sums are exact with the
    # 1/EMBED_DIM divisor; E[x^2]-mu^2 keeps padded lanes out of the variance;
    # zero-padded gamma/beta force padded lanes of y back to 0.
    inv_d = 1.0 / EMBED_DIM
    mu = jnp.sum(xp, axis=-1, keepdims=True) * inv_d
    var = jnp.sum(xp * xp, axis=-1, keepdims=True) * inv_d - mu * mu
    y = (xp - mu) * lax.rsqrt(var + LN_EPS) * g_ref[...] + beta_ref[...]

    # -- pred head: Linear -> GELU (exact erf, matching nn.GELU()) -> Linear --
    h = jnp.dot(y, w1_ref[...], preferred_element_type=jnp.float32) + b1_ref[...]
    h = 0.5 * h * (1.0 + lax.erf(h * INV_SQRT2))
    out_ref[...] = (jnp.dot(h, w2_ref[...], preferred_element_type=jnp.float32)
                    + b2_ref[...])


def _ssast_fused_call(patches, mask2d, addp, mtok, wpe, g, beta,
                      w1, b1, w2, b2):
    rows = patches.shape[0]

    def full(shape):
        return pl.BlockSpec(shape, lambda i, _n=len(shape): (0,) * _n)

    grid_spec = pltpu.PrefetchScalarGridSpec(
        num_scalar_prefetch=0,
        grid=(1,),                       # single step: batch folded into rows
        in_specs=[
            full((rows, LANE)),          # patches (lane padded)
            full((rows, 1)),             # mask column
            full((rows, LANE)),          # bias + pos, tiled over batch
            full((1, LANE)),             # mask token
            full((LANE, LANE)),          # patch-embed weight
            full((1, LANE)),             # ln gamma
            full((1, LANE)),             # ln beta
            full((LANE, LANE)),          # w1
            full((1, LANE)),             # b1
            full((LANE, LANE)),          # w2
            full((1, LANE)),             # b2
        ],
        out_specs=full((rows, LANE)),
    )
    return pl.pallas_call(
        _ssast_fused_kernel,
        out_shape=jax.ShapeDtypeStruct((rows, LANE), jnp.float32),
        grid_spec=grid_spec,
        compiler_params=pltpu.CompilerParams(
            dimension_semantics=("arbitrary",)),
    )(patches, mask2d, addp, mtok, wpe, g, beta, w1, b1, w2, b2)


# ---------------- glue (reshapes / parameter setup / RNG) --------------------
def _pad2(a, rows, cols):
    return jnp.pad(a, ((0, rows - a.shape[0]), (0, cols - a.shape[1])))


def patchify(imgs):
    """imgs (N, C, H, W) -> (N, L, ph*pw*C), matching BaseSSAST.patchify."""
    n, c, hh, ww = imgs.shape
    ph, pw = PATCH_SIZE
    h, w = hh // ph, ww // pw
    x = imgs.reshape(n, c, h, ph, w, pw)
    if FREQ_FIRST:
        x = jnp.einsum('nchpwq->nwhqpc', x)
    else:
        x = jnp.einsum('nchpwq->nhwpqc', x)
    return x.reshape(n, h * w, ph * pw * c)


def extract_conv_patches(imgs):
    """Patch extraction for the conv-as-matmul patch embed: (N, L, C*ph*pw).

    Patch vector ordered (c, ph, pw) to match Conv2d weight flattening.
    Sequence ordered w-major (frequency_first) to match patchify / pos_embed.
    """
    n, c, hh, ww = imgs.shape
    ph, pw = PATCH_SIZE
    h, w = hh // ph, ww // pw
    x = imgs.reshape(n, c, h, ph, w, pw)
    if FREQ_FIRST:
        x = jnp.transpose(x, (0, 4, 2, 1, 3, 5))   # (n, w, h, c, ph, pw)
    else:
        x = jnp.transpose(x, (0, 2, 4, 1, 3, 5))   # (n, h, w, c, ph, pw)
    return x.reshape(n, h * w, c * ph * pw)


def random_masking(key, n, l, mask_ratio):
    """Matches BaseSSAST.random_masking ('unstructured'). mask: 1 == masked."""
    len_keep = int(l * (100 - mask_ratio * 100) / 100)
    noise = jax.random.uniform(key, (n, l))
    ids_shuffle = jnp.argsort(noise, axis=1)
    ids_restore = jnp.argsort(ids_shuffle, axis=1)
    mask = jnp.ones((n, l), dtype=jnp.float32)
    mask = mask.at[:, :len_keep].set(0.0)
    mask = jnp.take_along_axis(mask, ids_restore, axis=1)
    return mask, ids_restore


def init_params(key):
    ks = jax.random.split(key, 9)
    p = {}
    # PatchEmbed conv: weight (D, C, ph, pw), bias (D,)
    p['pe_w'] = 0.02 * jax.random.normal(
        ks[0], (EMBED_DIM, IN_CHANS, PATCH_SIZE[0], PATCH_SIZE[1]), jnp.float32)
    p['pe_b'] = 0.02 * jax.random.normal(ks[1], (EMBED_DIM,), jnp.float32)
    p['pos_embed'] = 0.02 * jax.random.normal(
        ks[2], (1, NUM_PATCHES + 1, EMBED_DIM), jnp.float32)
    p['cls_token'] = 0.02 * jax.random.normal(ks[3], (1, 1, EMBED_DIM), jnp.float32)
    p['mask_token'] = 0.02 * jax.random.normal(ks[4], (1, 1, EMBED_DIM), jnp.float32)
    p['ln_g'] = jnp.ones((EMBED_DIM,), jnp.float32)
    p['ln_b'] = jnp.zeros((EMBED_DIM,), jnp.float32)
    # pred head: Linear(D, D) -> GELU -> Linear(D, PATCH_DIM); stored as (in, out)
    p['w1'] = 0.02 * jax.random.normal(ks[5], (EMBED_DIM, EMBED_DIM), jnp.float32)
    p['b1'] = 0.02 * jax.random.normal(ks[6], (EMBED_DIM,), jnp.float32)
    p['w2'] = 0.02 * jax.random.normal(ks[7], (EMBED_DIM, PATCH_DIM), jnp.float32)
    p['b2'] = 0.02 * jax.random.normal(ks[8], (PATCH_DIM,), jnp.float32)
    return p


@jax.jit
def ssast_forward(imgs, params, mask_key):
    b = imgs.shape[0]
    imgs = imgs.astype(jnp.float32)

    # reconstruction target (pure data movement)
    target = patchify(imgs)                                   # (B, L, PATCH_DIM)

    # patch-embed input + random masking (RNG / argsort / gather stay in JAX)
    patches = extract_conv_patches(imgs)                      # (B, L, PATCH_DIM)
    mask, _ids_restore = random_masking(mask_key, b, NUM_PATCHES, MASK_RATIO)

    # ---- fold batch into the sublane axis: one grid step for everything ----
    rows = b * NUM_PATCHES
    rows_pad = ((rows + 7) // 8) * 8                          # sublane multiple

    patches_pad = jnp.pad(patches.reshape(rows, PATCH_DIM),
                          ((0, rows_pad - rows), (0, LANE - PATCH_DIM)))
    mask2d = jnp.pad(mask.reshape(rows, 1), ((0, rows_pad - rows), (0, 0)))

    # parameter slabs, zero-padded once to 128 lanes (lane-dense vreg layout)
    addp = _pad2(params['pe_b'][None, :] + params['pos_embed'][0, 1:, :],
                 NUM_PATCHES, LANE)                           # (L, LANE)
    addp_tiled = jnp.pad(jnp.tile(addp, (b, 1)),
                         ((0, rows_pad - rows), (0, 0)))      # (rows_pad, LANE)
    wpe = _pad2(params['pe_w'].reshape(EMBED_DIM, PATCH_DIM).T, LANE, LANE)
    mtok = _pad2(params['mask_token'][0], 1, LANE)
    g = _pad2(params['ln_g'][None, :], 1, LANE)
    beta = _pad2(params['ln_b'][None, :], 1, LANE)
    w1 = _pad2(params['w1'], LANE, LANE)
    b1 = _pad2(params['b1'][None, :], 1, LANE)
    w2 = _pad2(params['w2'], LANE, LANE)
    b2 = _pad2(params['b2'][None, :], 1, LANE)

    out = _ssast_fused_call(patches_pad, mask2d, addp_tiled, mtok, wpe,
                            g, beta, w1, b1, w2, b2)
    pred = out[:rows, :PATCH_DIM].reshape(b, NUM_PATCHES, PATCH_DIM)
    return pred, target, None                                 # matches module's return


def _forward_ref(imgs, params, mask_key):
    """Pure-JAX reference (same math, un-padded, with the CLS token kept and
    sliced off exactly like the PyTorch module) for a correctness check."""
    b = imgs.shape[0]
    imgs = imgs.astype(jnp.float32)
    patches = extract_conv_patches(imgs)
    mask, _ = random_masking(mask_key, b, NUM_PATCHES, MASK_RATIO)
    w = params['pe_w'].reshape(EMBED_DIM, PATCH_DIM).T
    x = patches @ w + params['pe_b'] + params['pos_embed'][0, 1:, :]
    m = mask[..., None]
    x = x * (1.0 - m) + params['mask_token'][0] * m
    cls = params['cls_token'] + params['pos_embed'][:, :1, :]
    x = jnp.concatenate([jnp.broadcast_to(cls, (b, 1, EMBED_DIM)), x], axis=1)
    mu = x.mean(-1, keepdims=True)
    xc = x - mu
    var = (xc * xc).mean(-1, keepdims=True)
    y = xc * lax.rsqrt(var + LN_EPS) * params['ln_g'] + params['ln_b']
    h = y @ params['w1'] + params['b1']
    h = 0.5 * h * (1.0 + lax.erf(h * INV_SQRT2))
    out = h @ params['w2'] + params['b2']
    return out[:, 1:, :]


if __name__ == "__main__":
    root = jax.random.PRNGKey(0)
    k_img, k_par, k_mask = jax.random.split(root, 3)

    imgs = jax.random.normal(
        k_img, (BATCH, IN_CHANS, IMG_SIZE[0], IMG_SIZE[1]), jnp.float32)
    params = init_params(k_par)

    pred, target, _ = ssast_forward(imgs, params, k_mask)
    jax.block_until_ready((pred, target))

    assert pred.shape == (BATCH, NUM_PATCHES, PATCH_DIM)
    assert target.shape == (BATCH, NUM_PATCHES, PATCH_DIM)
    assert bool(jnp.all(jnp.isfinite(pred)))

    pred_ref = _forward_ref(imgs, params, k_mask)
    assert bool(jnp.allclose(pred, pred_ref, atol=2e-3, rtol=2e-2))

    print("KERNEL_OK")
</pallas_src>

<mosaic_0001>
module attributes {stable_mosaic.version = 11 : i64} {
  func.func @_ssast_fused_kernel(%arg0: i32, %arg1: memref<32x128xf32, #tpu.memory_space<vmem>>, %arg2: memref<32x1xf32, #tpu.memory_space<vmem>>, %arg3: memref<32x128xf32, #tpu.memory_space<vmem>>, %arg4: memref<1x128xf32, #tpu.memory_space<vmem>>, %arg5: memref<128x128xf32, #tpu.memory_space<vmem>>, %arg6: memref<1x128xf32, #tpu.memory_space<vmem>>, %arg7: memref<1x128xf32, #tpu.memory_space<vmem>>, %arg8: memref<128x128xf32, #tpu.memory_space<vmem>>, %arg9: memref<1x128xf32, #tpu.memory_space<vmem>>, %arg10: memref<128x128xf32, #tpu.memory_space<vmem>>, %arg11: memref<1x128xf32, #tpu.memory_space<vmem>>, %arg12: memref<32x128xf32, #tpu.memory_space<vmem>>) attributes {dimension_semantics = [#tpu.dimension_semantics<arbitrary>], iteration_bounds = array<i64: 1>, scalar_prefetch = 0 : i64, scratch_operands = 0 : i64, tpu.core_type = #tpu.core_type<tc>, window_params = [{pipeline_mode = #tpu.pipeline_mode<synchronous>, transform_indices = @transform_0, window_bounds = array<i64: 32, 128>}, {pipeline_mode = #tpu.pipeline_mode<synchronous>, transform_indices = @transform_1, window_bounds = array<i64: 32, 1>}, {pipeline_mode = #tpu.pipeline_mode<synchronous>, transform_indices = @transform_2, window_bounds = array<i64: 32, 128>}, {pipeline_mode = #tpu.pipeline_mode<synchronous>, transform_indices = @transform_3, window_bounds = array<i64: 1, 128>}, {pipeline_mode = #tpu.pipeline_mode<synchronous>, transform_indices = @transform_4, window_bounds = array<i64: 128, 128>}, {pipeline_mode = #tpu.pipeline_mode<synchronous>, transform_indices = @transform_5, window_bounds = array<i64: 1, 128>}, {pipeline_mode = #tpu.pipeline_mode<synchronous>, transform_indices = @transform_6, window_bounds = array<i64: 1, 128>}, {pipeline_mode = #tpu.pipeline_mode<synchronous>, transform_indices = @transform_7, window_bounds = array<i64: 128, 128>}, {pipeline_mode = #tpu.pipeline_mode<synchronous>, transform_indices = @transform_8, window_bounds = array<i64: 1, 128>}, {pipeline_mode = #tpu.pipeline_mode<synchronous>, transform_indices = @transform_9, window_bounds = array<i64: 128, 128>}, {pipeline_mode = #tpu.pipeline_mode<synchronous>, transform_indices = @transform_10, window_bounds = array<i64: 1, 128>}, {pipeline_mode = #tpu.pipeline_mode<synchronous>, transform_indices = @transform_11, window_bounds = array<i64: 32, 128>}]} {
    %c0 = arith.constant 0 : index
    %c0_0 = arith.constant 0 : index
    %0 = vector.load %arg1[%c0, %c0_0] : memref<32x128xf32, #tpu.memory_space<vmem>>, vector<32x128xf32>
    %c0_1 = arith.constant 0 : index
    %c0_2 = arith.constant 0 : index
    %1 = vector.load %arg5[%c0_1, %c0_2] : memref<128x128xf32, #tpu.memory_space<vmem>>, vector<128x128xf32>
    %cst = arith.constant dense<0.000000e+00> : vector<32x128xf32>
    %2 = tpu.matmul %0, %1, %cst {dimension_numbers = #tpu.dot_dimension_numbers<[1], [0], [0], [1], [0, 0, 1, 1], [], []>} : vector<32x128xf32>, vector<128x128xf32>, vector<32x128xf32> -> vector<32x128xf32>
    %c0_3 = arith.constant 0 : index
    %c0_4 = arith.constant 0 : index
    %3 = vector.load %arg3[%c0_3, %c0_4] : memref<32x128xf32, #tpu.memory_space<vmem>>, vector<32x128xf32>
    %4 = arith.addf %2, %3 : vector<32x128xf32>
    %c0_5 = arith.constant 0 : index
    %c0_6 = arith.constant 0 : index
    %5 = vector.load %arg2[%c0_5, %c0_6] : memref<32x1xf32, #tpu.memory_space<vmem>>, vector<32x1xf32>
    %cst_7 = arith.constant 0.000000e+00 : f32
    %6 = vector.broadcast %cst_7 : f32 to vector<32x1xf32>
    %7 = arith.cmpf one, %5, %6 : vector<32x1xf32>
    %c0_8 = arith.constant 0 : index
    %c0_9 = arith.constant 0 : index
    %8 = vector.load %arg4[%c0_8, %c0_9] : memref<1x128xf32, #tpu.memory_space<vmem>>, vector<1x128xf32>
    %9 = vector.shape_cast %7 : vector<32x1xi1> to vector<32x1xi1>
    %10 = vector.broadcast %9 : vector<32x1xi1> to vector<32x128xi1>
    %11 = vector.shape_cast %8 : vector<1x128xf32> to vector<1x128xf32>
    %12 = vector.broadcast %11 : vector<1x128xf32> to vector<32x128xf32>
    %13 = arith.select %10, %12, %4 : vector<32x128xi1>, vector<32x128xf32>
    %cst_10 = arith.constant dense<0.000000e+00> : vector<32xf32>
    %14 = vector.multi_reduction <add>, %13, %cst_10 [1] : vector<32x128xf32> to vector<32xf32>
    %15 = vector.shape_cast %14 : vector<32xf32> to vector<32x1xf32>
    %cst_11 = arith.constant 3.125000e-02 : f32
    %16 = vector.broadcast %cst_11 : f32 to vector<32x1xf32>
    %17 = arith.mulf %15, %16 : vector<32x1xf32>
    %18 = arith.mulf %13, %13 : vector<32x128xf32>
    %cst_12 = arith.constant dense<0.000000e+00> : vector<32xf32>
    %19 = vector.multi_reduction <add>, %18, %cst_12 [1] : vector<32x128xf32> to vector<32xf32>
    %20 = vector.shape_cast %19 : vector<32xf32> to vector<32x1xf32>
    %cst_13 = arith.constant 3.125000e-02 : f32
    %21 = vector.broadcast %cst_13 : f32 to vector<32x1xf32>
    %22 = arith.mulf %20, %21 : vector<32x1xf32>
    %23 = arith.mulf %17, %17 : vector<32x1xf32>
    %24 = arith.subf %22, %23 : vector<32x1xf32>
    %25 = vector.broadcast %17 : vector<32x1xf32> to vector<32x128xf32>
    %26 = arith.subf %13, %25 : vector<32x128xf32>
    %cst_14 = arith.constant 9.99999997E-7 : f32
    %27 = vector.broadcast %cst_14 : f32 to vector<32x1xf32>
    %28 = arith.addf %24, %27 : vector<32x1xf32>
    %29 = math.rsqrt %28 : vector<32x1xf32>
    %30 = vector.broadcast %29 : vector<32x1xf32> to vector<32x128xf32>
    %31 = arith.mulf %26, %30 : vector<32x128xf32>
    %c0_15 = arith.constant 0 : index
    %c0_16 = arith.constant 0 : index
    %32 = vector.load %arg6[%c0_15, %c0_16] : memref<1x128xf32, #tpu.memory_space<vmem>>, vector<1x128xf32>
    %33 = vector.broadcast %32 : vector<1x128xf32> to vector<32x128xf32>
    %34 = arith.mulf %31, %33 : vector<32x128xf32>
    %c0_17 = arith.constant 0 : index
    %c0_18 = arith.constant 0 : index
    %35 = vector.load %arg7[%c0_17, %c0_18] : memref<1x128xf32, #tpu.memory_space<vmem>>, vector<1x128xf32>
    %36 = vector.broadcast %35 : vector<1x128xf32> to vector<32x128xf32>
    %37 = arith.addf %34, %36 : vector<32x128xf32>
    %c0_19 = arith.constant 0 : index
    %c0_20 = arith.constant 0 : index
    %38 = vector.load %arg8[%c0_19, %c0_20] : memref<128x128xf32, #tpu.memory_space<vmem>>, vector<128x128xf32>
    %cst_21 = arith.constant dense<0.000000e+00> : vector<32x128xf32>
    %39 = tpu.matmul %37, %38, %cst_21 {dimension_numbers = #tpu.dot_dimension_numbers<[1], [0], [0], [1], [0, 0, 1, 1], [], []>} : vector<32x128xf32>, vector<128x128xf32>, vector<32x128xf32> -> vector<32x128xf32>
    %c0_22 = arith.constant 0 : index
    %c0_23 = arith.constant 0 : index
    %40 = vector.load %arg9[%c0_22, %c0_23] : memref<1x128xf32, #tpu.memory_space<vmem>>, vector<1x128xf32>
    %41 = vector.broadcast %40 : vector<1x128xf32> to vector<32x128xf32>
    %42 = arith.addf %39, %41 : vector<32x128xf32>
    %cst_24 = arith.constant 5.000000e-01 : f32
    %43 = vector.broadcast %cst_24 : f32 to vector<32x128xf32>
    %44 = arith.mulf %43, %42 : vector<32x128xf32>
    %cst_25 = arith.constant 0.707106769 : f32
    %45 = vector.broadcast %cst_25 : f32 to vector<32x128xf32>
    %46 = arith.mulf %42, %45 : vector<32x128xf32>
    %47 = math.erf %46 : vector<32x128xf32>
    %cst_26 = arith.constant 1.000000e+00 : f32
    %48 = vector.broadcast %cst_26 : f32 to vector<32x128xf32>
    %49 = arith.addf %48, %47 : vector<32x128xf32>
    %50 = arith.mulf %44, %49 : vector<32x128xf32>
    %c0_27 = arith.constant 0 : index
    %c0_28 = arith.constant 0 : index
    %51 = vector.load %arg10[%c0_27, %c0_28] : memref<128x128xf32, #tpu.memory_space<vmem>>, vector<128x128xf32>
    %cst_29 = arith.constant dense<0.000000e+00> : vector<32x128xf32>
    %52 = tpu.matmul %50, %51, %cst_29 {dimension_numbers = #tpu.dot_dimension_numbers<[1], [0], [0], [1], [0, 0, 1, 1], [], []>} : vector<32x128xf32>, vector<128x128xf32>, vector<32x128xf32> -> vector<32x128xf32>
    %c0_30 = arith.constant 0 : index
    %c0_31 = arith.constant 0 : index
    %53 = vector.load %arg11[%c0_30, %c0_31] : memref<1x128xf32, #tpu.memory_space<vmem>>, vector<1x128xf32>
    %54 = vector.broadcast %53 : vector<1x128xf32> to vector<32x128xf32>
    %55 = arith.addf %52, %54 : vector<32x128xf32>
    %c0_32 = arith.constant 0 : index
    %c0_33 = arith.constant 0 : index
    %56 = vector.load %arg12[%c0_32, %c0_33] : memref<32x128xf32, #tpu.memory_space<vmem>>, vector<32x128xf32>
    tpu.vector_store %arg12[%c0_32, %c0_33], %55 {strides = array<i32>} : memref<32x128xf32, #tpu.memory_space<vmem>>, vector<32x128xf32>,
    return
  }
  func.func @transform_0(%arg0: i32) -> (i32, i32) {
    %c0_i32 = arith.constant 0 : i32
    %c0_i32_0 = arith.constant 0 : i32
    %c0_i32_1 = arith.constant 0 : i32
    return %c0_i32, %c0_i32_0 : i32, i32
  }
  func.func @transform_1(%arg0: i32) -> (i32, i32) {
    %c0_i32 = arith.constant 0 : i32
    %c0_i32_0 = arith.constant 0 : i32
    %c0_i32_1 = arith.constant 0 : i32
    return %c0_i32, %c0_i32_0 : i32, i32
  }
  func.func @transform_2(%arg0: i32) -> (i32, i32) {
    %c0_i32 = arith.constant 0 : i32
    %c0_i32_0 = arith.constant 0 : i32
    %c0_i32_1 = arith.constant 0 : i32
    return %c0_i32, %c0_i32_0 : i32, i32
  }
  func.func @transform_3(%arg0: i32) -> (i32, i32) {
    %c0_i32 = arith.constant 0 : i32
    %c0_i32_0 = arith.constant 0 : i32
    %c0_i32_1 = arith.constant 0 : i32
    return %c0_i32, %c0_i32_0 : i32, i32
  }
  func.func @transform_4(%arg0: i32) -> (i32, i32) {
    %c0_i32 = arith.constant 0 : i32
    %c0_i32_0 = arith.constant 0 : i32
    %c0_i32_1 = arith.constant 0 : i32
    return %c0_i32, %c0_i32_0 : i32, i32
  }
  func.func @transform_5(%arg0: i32) -> (i32, i32) {
    %c0_i32 = arith.constant 0 : i32
    %c0_i32_0 = arith.constant 0 : i32
    %c0_i32_1 = arith.constant 0 : i32
    return %c0_i32, %c0_i32_0 : i32, i32
  }
  func.func @transform_6(%arg0: i32) -> (i32, i32) {
    %c0_i32 = arith.constant 0 : i32
    %c0_i32_0 = arith.constant 0 : i32
    %c0_i32_1 = arith.constant 0 : i32
    return %c0_i32, %c0_i32_0 : i32, i32
  }
  func.func @transform_7(%arg0: i32) -> (i32, i32) {
    %c0_i32 = arith.constant 0 : i32
    %c0_i32_0 = arith.constant 0 : i32
    %c0_i32_1 = arith.constant 0 : i32
    return %c0_i32, %c0_i32_0 : i32, i32
  }
  func.func @transform_8(%arg0: i32) -> (i32, i32) {
    %c0_i32 = arith.constant 0 : i32
    %c0_i32_0 = arith.constant 0 : i32
    %c0_i32_1 = arith.constant 0 : i32
    return %c0_i32, %c0_i32_0 : i32, i32
  }
  func.func @transform_9(%arg0: i32) -> (i32, i32) {
    %c0_i32 = arith.constant 0 : i32
    %c0_i32_0 = arith.constant 0 : i32
    %c0_i32_1 = arith.constant 0 : i32
    return %c0_i32, %c0_i32_0 : i32, i32
  }
  func.func @transform_10(%arg0: i32) -> (i32, i32) {
    %c0_i32 = arith.constant 0 : i32
    %c0_i32_0 = arith.constant 0 : i32
    %c0_i32_1 = arith.constant 0 : i32
    return %c0_i32, %c0_i32_0 : i32, i32
  }
  func.func @transform_11(%arg0: i32) -> (i32, i32) {
    %c0_i32 = arith.constant 0 : i32
    %c0_i32_0 = arith.constant 0 : i32
    %c0_i32_1 = arith.constant 0 : i32
    return %c0_i32, %c0_i32_0 : i32, i32
  }
}

</mosaic_0001>

<llo_original>
// kernel: ssast_forward.1
$region0: #{ssast_forward.1}
  #allocation0 [shape = 'u32[]', space=smem, size = 0x4, offset = 0x4, fixed_abs, tag = 'smem constant byte address 0x4 - core index']
  #allocation1 [shape = 'u32[144,128]{1,0:T(1,128)}', space=vmem, size = 0x12000, scoped, tag = 'internal scratch']
  %s0 = inlined_call_operand.vmem [shape: f32[32,128], index: 0, kind: input, shape index: {}]
  %s1 = inlined_call_operand.vmem [shape: f32[32,1], index: 1, kind: input, shape index: {}]
  %s2 = inlined_call_operand.vmem [shape: f32[32,128], index: 2, kind: input, shape index: {}]
  %s3 = inlined_call_operand.vmem [shape: f32[1,128], index: 3, kind: input, shape index: {}]
  %s4 = inlined_call_operand.vmem [shape: f32[128,128], index: 4, kind: input, shape index: {}]
  %s5 = inlined_call_operand.vmem [shape: f32[1,128], index: 5, kind: input, shape index: {}]
  %s6 = inlined_call_operand.vmem [shape: f32[1,128], index: 6, kind: input, shape index: {}]
  %s7 = inlined_call_operand.vmem [shape: f32[128,128], index: 7, kind: input, shape index: {}]
  %s8 = inlined_call_operand.vmem [shape: f32[1,128], index: 8, kind: input, shape index: {}]
  %s9 = inlined_call_operand.vmem [shape: f32[128,128], index: 9, kind: input, shape index: {}]
  %s10 = inlined_call_operand.vmem [shape: f32[1,128], index: 10, kind: input, shape index: {}]
  %s11 = inlined_call_operand.hbm [shape: f32[32,128], index: 11, kind: output, shape index: {}]
  %s12 = sld [smem:[#allocation0]]
  $region54: #{ssast_forward.1} parent=0
    _
  %s14 = ssub.s32 1, %s12
  %s15 = scalar_select 0, %s14, %s12
  $region1: #{ssast_forward.1} parent=0
    #allocation2 [shape = 'u8[16384]{0}', space=vmem, size = 0x4000, scoped, tag = 'output window, operand 0, single buffered']
    #allocation3 [shape = 's32[1]{0}', space=sflag, size = 0x4, scoped, tag = 'scoped memory for ssast_forward.1']
    %16 = vsyncpa [#allocation3], 0
    // Predicated region
    $region2: #{ssast_forward.1} parent=1 // pred_check
      _
    $region3: #{ssast_forward.1} parent=1 // pred_check_branch
      %18 = sbr.rel (0) target = $region5
    $region4: #{ssast_forward.1} parent=1 // pred_region
      _
    $region5: #{ssast_forward.1} parent=1 // pred_fallthru
      _
    // Predicated region
    $region6: #{ssast_forward.1} parent=1 // pred_check
      _
    $region7: #{ssast_forward.1} parent=1 // pred_check_branch
      %20 = sbr.rel (0) target = $region9
    $region8: #{ssast_forward.1} parent=1 // pred_region
      _
    $region9: #{ssast_forward.1} parent=1 // pred_fallthru
      _
    // Predicated region
    $region10: #{ssast_forward.1} parent=1 // pred_check
      _
    $region11: #{ssast_forward.1} parent=1 // pred_check_branch
      %22 = sbr.rel (0) target = $region13
    $region12: #{ssast_forward.1} parent=1 // pred_region
      _
    $region13: #{ssast_forward.1} parent=1 // pred_fallthru
      _
    // Predicated region
    $region14: #{ssast_forward.1} parent=1 // pred_check
      _
    $region15: #{ssast_forward.1} parent=1 // pred_check_branch
      %24 = sbr.rel (0) target = $region17
    $region16: #{ssast_forward.1} parent=1 // pred_region
      _
    $region17: #{ssast_forward.1} parent=1 // pred_fallthru
      _
    // Predicated region
    $region18: #{ssast_forward.1} parent=1 // pred_check
      _
    $region19: #{ssast_forward.1} parent=1 // pred_check_branch
      %26 = sbr.rel (0) target = $region21
    $region20: #{ssast_forward.1} parent=1 // pred_region
      _
    $region21: #{ssast_forward.1} parent=1 // pred_fallthru
      _
    // Predicated region
    $region22: #{ssast_forward.1} parent=1 // pred_check
      _
    $region23: #{ssast_forward.1} parent=1 // pred_check_branch
      %28 = sbr.rel (0) target = $region25
    $region24: #{ssast_forward.1} parent=1 // pred_region
      _
    $region25: #{ssast_forward.1} parent=1 // pred_fallthru
      _
    // Predicated region
    $region26: #{ssast_forward.1} parent=1 // pred_check
      _
    $region27: #{ssast_forward.1} parent=1 // pred_check_branch
      %30 = sbr.rel (0) target = $region29
    $region28: #{ssast_forward.1} parent=1 // pred_region
      _
    $region29: #{ssast_forward.1} parent=1 // pred_fallthru
      _
    // Predicated region
    $region30: #{ssast_forward.1} parent=1 // pred_check
      _
    $region31: #{ssast_forward.1} parent=1 // pred_check_branch
      %32 = sbr.rel (0) target = $region33
    $region32: #{ssast_forward.1} parent=1 // pred_region
      _
    $region33: #{ssast_forward.1} parent=1 // pred_fallthru
      _
    // Predicated region
    $region34: #{ssast_forward.1} parent=1 // pred_check
      _
    $region35: #{ssast_forward.1} parent=1 // pred_check_branch
      %34 = sbr.rel (0) target = $region37
    $region36: #{ssast_forward.1} parent=1 // pred_region
      _
    $region37: #{ssast_forward.1} parent=1 // pred_fallthru
      _
    // Predicated region
    $region38: #{ssast_forward.1} parent=1 // pred_check
      _
    $region39: #{ssast_forward.1} parent=1 // pred_check_branch
      %36 = sbr.rel (0) target = $region41
    $region40: #{ssast_forward.1} parent=1 // pred_region
      _
    $region41: #{ssast_forward.1} parent=1 // pred_fallthru
      _
    // Predicated region
    $region42: #{ssast_forward.1} parent=1 // pred_check
      _
    $region43: #{ssast_forward.1} parent=1 // pred_check_branch
      %38 = sbr.rel (0) target = $region45
    $region44: #{ssast_forward.1} parent=1 // pred_region
      _
    $region45: #{ssast_forward.1} parent=1 // pred_fallthru
      _
    %v39 = vld [vmem:[%s0] sm:$0xff]
    %v40 = vld [vmem:[%s0 + $0x8] sm:$0xff]
    %v41 = vld [vmem:[%s0 + $0x10] sm:$0xff]
    %v42 = vld [vmem:[%s0 + $0x18] sm:$0xff]
    %v43 = vld [vmem:[%s4] sm:$0xff]
    %v44 = vld [vmem:[%s4 + $0x8] sm:$0xff]
    %v45 = vld [vmem:[%s4 + $0x10] sm:$0xff]
    %v46 = vld [vmem:[%s4 + $0x18] sm:$0xff]
    %v47 = vld [vmem:[%s4 + $0x20] sm:$0xff]
    %v48 = vld [vmem:[%s4 + $0x28] sm:$0xff]
    %v49 = vld [vmem:[%s4 + $0x30] sm:$0xff]
    %v50 = vld [vmem:[%s4 + $0x38] sm:$0xff]
    %v51 = vld [vmem:[%s4 + $0x40] sm:$0xff]
    %v52 = vld [vmem:[%s4 + $0x48] sm:$0xff]
    %v53 = vld [vmem:[%s4 + $0x50] sm:$0xff]
    %v54 = vld [vmem:[%s4 + $0x58] sm:$0xff]
    %v55 = vld [vmem:[%s4 + $0x60] sm:$0xff]
    %v56 = vld [vmem:[%s4 + $0x68] sm:$0xff]
    %v57 = vld [vmem:[%s4 + $0x70] sm:$0xff]
    %v58 = vld [vmem:[%s4 + $0x78] sm:$0xff]
    %v59 = vld [vmem:[%s2] sm:$0xff]
    %v60 = vld [vmem:[%s2 + $0x8] sm:$0xff]
    %v61 = vld [vmem:[%s2 + $0x10] sm:$0xff]
    %v62 = vld [vmem:[%s2 + $0x18] sm:$0xff]
    %63 = vmatprep.subr.mxu0 0.0
    %64 = vmatpush1.msra.mxu0 %v43
    %65 = vmatprep.subr.mxu0 0.0
    %66 = vmatpush1.msra.mxu0 %v44
    %67 = vmatprep.subr.mxu0 0.0
    %68 = vmatpush1.msra.mxu0 %v45
    %69 = vmatprep.subr.mxu0 0.0
    %70 = vmatpush1.msra.mxu0 %v46
    %71 = vmatprep.subr.mxu0 0.0
    %72 = vmatpush1.msra.mxu0 %v47
    %73 = vmatprep.subr.mxu0 0.0
    %74 = vmatpush1.msra.mxu0 %v48
    %75 = vmatprep.subr.mxu0 0.0
    %76 = vmatpush1.msra.mxu0 %v49
    %77 = vmatprep.subr.mxu0 0.0
    %78 = vmatpush1.msra.mxu0 %v50
    %79 = vmatprep.subr.mxu0 0.0
    %80 = vmatpush1.msra.mxu0 %v51
    %81 = vmatprep.subr.mxu0 0.0
    %82 = vmatpush1.msra.mxu0 %v52
    %83 = vmatprep.subr.mxu0 0.0
    %84 = vmatpush1.msra.mxu0 %v53
    %85 = vmatprep.subr.mxu0 0.0
    %86 = vmatpush1.msra.mxu0 %v54
    %87 = vmatprep.subr.mxu0 0.0
    %88 = vmatpush1.msra.mxu0 %v55
    %89 = vmatprep.subr.mxu0 0.0
    %90 = vmatpush1.msra.mxu0 %v56
    %91 = vmatprep.subr.mxu0 0.0
    %92 = vmatpush1.msra.mxu0 %v57
    %93 = vmatprep.subr.mxu0 0.0
    %94 = vmatpush1.msra.mxu0 %v58
    %95 = vmatprep.subr.mxu0 0.0
    %96 = vmatpush1.msra.mxu0 0.0
    %97 = vmatprep.subr.mxu0 0.0
    %98 = vmatpush1.msra.mxu0 0.0
    %99 = vmatprep.subr.mxu0 0.0
    %100 = vmatpush1.msra.mxu0 0.0
    %101 = vmatprep.subr.mxu0 0.0
    %102 = vmatpush1.msra.mxu0 0.0
    %103 = vmatprep.subr.mxu0 0.0
    %104 = vmatpush1.msra.mxu0 0.0
    %105 = vmatprep.subr.mxu0 0.0
    %106 = vmatpush1.msra.mxu0 0.0
    %107 = vmatprep.subr.mxu0 0.0
    %108 = vmatpush1.msra.mxu0 0.0
    %109 = vmatprep.subr.mxu0 0.0
    %110 = vmatpush1.msra.mxu0 0.0
    %111 = vmatprep.subr.mxu0 0.0
    %112 = vmatpush1.msra.mxu0 0.0
    %113 = vmatprep.subr.mxu0 0.0
    %114 = vmatpush1.msra.mxu0 0.0
    %115 = vmatprep.subr.mxu0 0.0
    %116 = vmatpush1.msra.mxu0 0.0
    %117 = vmatprep.subr.mxu0 0.0
    %118 = vmatpush1.msra.mxu0 0.0
    %119 = vmatprep.subr.mxu0 0.0
    %120 = vmatpush1.msra.mxu0 0.0
    %121 = vmatprep.subr.mxu0 0.0
    %122 = vmatpush1.msra.mxu0 0.0
    %123 = vmatprep.subr.mxu0 0.0
    %124 = vmatpush1.msra.mxu0 0.0
    %125 = vmatprep.subr.mxu0 0.0
    %126 = vmatpush1.msra.mxu0 0.0
    %127 = vmatprep.mubr.f32.mxu0 0.0
    %128 = vmatmul.mubr.f32.gmra.mrb[0].mxu0 %v39
    %v129 = vpop.f32.mrb[0].mxu0
    %v130 = vadd.f32 %v59, %v129
    %v131 = vpop.f32.mrb[0].mxu0
    %132 = vmatprep.mubr.f32.mxu0 0.0
    %133 = vmatmul.mubr.f32.gmra.mrb[0].mxu0 %v40
    %v134 = vpop.f32.mrb[0].mxu0
    %v135 = vadd.f32 %v60, %v134
    %v136 = vpop.f32.mrb[0].mxu0
    %137 = vmatprep.mubr.f32.mxu0 0.0
    %138 = vmatmul.mubr.f32.gmra.mrb[0].mxu0 %v41
    %v139 = vpop.f32.mrb[0].mxu0
    %v140 = vadd.f32 %v61, %v139
    %v141 = vpop.f32.mrb[0].mxu0
    %142 = vmatprep.mubr.f32.mxu0 0.0
    %143 = vmatmul.mubr.f32.gmra.mrb[0].mxu0 %v42
    %v144 = vpop.f32.mrb[0].mxu0
    %v145 = vadd.f32 %v62, %v144
    %v146 = vpop.f32.mrb[0].mxu0
    %147 = vdwg.mxu0
    %v148 = vld [vmem:[%s1] sm:$0xff]
    %v149 = vld [vmem:[%s1 + $0x8] sm:$0xff]
    %v150 = vld [vmem:[%s1 + $0x10] sm:$0xff]
    %v151 = vld [vmem:[%s1 + $0x18] sm:$0xff]
    %vm152 = vcmp.ne.f32.partialorder %v148, 0.0
    %vm153 = vcmp.ne.f32.partialorder %v149, 0.0
    %vm154 = vcmp.ne.f32.partialorder %v150, 0.0
    %vm155 = vcmp.ne.f32.partialorder %v151, 0.0
    %v156 = vld [vmem:[%s3] sm:$0x1]
    %v157 = vsel %vm152, 1, 0
    %v158 = vsel %vm153, 1, 0
    %v159 = vsel %vm154, 1, 0
    %v160 = vsel %vm155, 1, 0
    %161 = vset.pattern.permute.xlu0 0
    %162 = vperm.xlu0 %161, %v157
    %v163 = vpop.permute.xlu0 %162
    %164 = vset.pattern.permute.xlu0 0
    %165 = vperm.xlu0 %164, %v158
    %v166 = vpop.permute.xlu0 %165
    %167 = vset.pattern.permute.xlu0 0
    %168 = vperm.xlu0 %167, %v159
    %v169 = vpop.permute.xlu0 %168
    %170 = vset.pattern.permute.xlu0 0
    %171 = vperm.xlu0 %170, %v160
    %v172 = vpop.permute.xlu0 %171
    %vm173 = vcmp.eq.s32.totalorder %v163, 1
    %vm174 = vcmp.eq.s32.totalorder %v166, 1
    %vm175 = vcmp.eq.s32.totalorder %v169, 1
    %vm176 = vcmp.eq.s32.totalorder %v172, 1
    %v178 = vlaneseq
    %v179 = vshrl.u32 %v178, 7
    %v180 = vsub.s32 0, %v179
    %v181 = vrot.slane %v156, %v180
    %v183 = vsel %vm173, %v181, %v130
    %v184 = vsel %vm174, %v181, %v135
    %v185 = vsel %vm175, %v181, %v140
    %v186 = vsel %vm176, %v181, %v145
    %187 = vadd.xlane.f32.xlu0 %v183
    %v188 = vpop.xlane.xlu0 %187
    %189 = vadd.xlane.f32.xlu0 %v184
    %v190 = vpop.xlane.xlu0 %189
    %191 = vadd.xlane.f32.xlu0 %v185
    %v192 = vpop.xlane.xlu0 %191
    %193 = vadd.xlane.f32.xlu0 %v186
    %v194 = vpop.xlane.xlu0 %193
    %v195 = vmul.f32 %v188, 0.03125
    %v196 = vmul.f32 %v190, 0.03125
    %v197 = vmul.f32 %v192, 0.03125
    %v198 = vmul.f32 %v194, 0.03125
    %v199 = vmul.f32 %v183, %v183
    %v200 = vmul.f32 %v184, %v184
    %v201 = vmul.f32 %v185, %v185
    %v202 = vmul.f32 %v186, %v186
    %203 = vadd.xlane.f32.xlu0 %v199
    %v204 = vpop.xlane.xlu0 %203
    %205 = vadd.xlane.f32.xlu0 %v200
    %v206 = vpop.xlane.xlu0 %205
    %207 = vadd.xlane.f32.xlu0 %v201
    %v208 = vpop.xlane.xlu0 %207
    %209 = vadd.xlane.f32.xlu0 %v202
    %v210 = vpop.xlane.xlu0 %209
    %v211 = vmul.f32 %v204, 0.03125
    %v212 = vmul.f32 %v206, 0.03125
    %v213 = vmul.f32 %v208, 0.03125
    %v214 = vmul.f32 %v210, 0.03125
    %v215 = vmul.f32 %v195, %v195
    %v216 = vmul.f32 %v196, %v196
    %v217 = vmul.f32 %v197, %v197
    %v218 = vmul.f32 %v198, %v198
    %v219 = vsub.f32 %v211, %v215
    %v220 = vsub.f32 %v212, %v216
    %v221 = vsub.f32 %v213, %v217
    %v222 = vsub.f32 %v214, %v218
    %v223 = vsub.f32 %v183, %v195
    %v224 = vsub.f32 %v184, %v196
    %v225 = vsub.f32 %v185, %v197
    %v226 = vsub.f32 %v186, %v198
    %v227 = vadd.f32 %v219, 1e-06
    %v228 = vadd.f32 %v220, 1e-06
    %v229 = vadd.f32 %v221, 1e-06
    %v230 = vadd.f32 %v222, 1e-06
    %v231 = vrsqrt.pop %v227
    %v232 = vrsqrt.pop %v228
    %v233 = vrsqrt.pop %v229
    %v234 = vrsqrt.pop %v230
    %v235 = vmul.f32 %v223, %v231
    %v236 = vmul.f32 %v224, %v232
    %v237 = vmul.f32 %v225, %v233
    %v238 = vmul.f32 %v226, %v234
    %v239 = vld [vmem:[%s5] sm:$0x1]
    %v241 = vlaneseq
    %v242 = vshrl.u32 %v241, 7
    %v243 = vsub.s32 0, %v242
    %v244 = vrot.slane %v239, %v243
    %v246 = vmul.f32 %v235, %v244
    %v247 = vmul.f32 %v236, %v244
    %v248 = vmul.f32 %v237, %v244
    %v249 = vmul.f32 %v238, %v244
    %v250 = vld [vmem:[%s6] sm:$0x1]
    %v252 = vlaneseq
    %v253 = vshrl.u32 %v252, 7
    %v254 = vsub.s32 0, %v253
    %v255 = vrot.slane %v250, %v254
    %v257 = vadd.f32 %v246, %v255
    %v258 = vadd.f32 %v247, %v255
    %v259 = vadd.f32 %v248, %v255
    %v260 = vadd.f32 %v249, %v255
    %v261 = vld [vmem:[%s7] sm:$0xff]
    %v262 = vld [vmem:[%s7 + $0x8] sm:$0xff]
    %v263 = vld [vmem:[%s7 + $0x10] sm:$0xff]
    %v264 = vld [vmem:[%s7 + $0x18] sm:$0xff]
    %v265 = vld [vmem:[%s7 + $0x20] sm:$0xff]
    %v266 = vld [vmem:[%s7 + $0x28] sm:$0xff]
    %v267 = vld [vmem:[%s7 + $0x30] sm:$0xff]
    %v268 = vld [vmem:[%s7 + $0x38] sm:$0xff]
    %v269 = vld [vmem:[%s7 + $0x40] sm:$0xff]
    %v270 = vld [vmem:[%s7 + $0x48] sm:$0xff]
    %v271 = vld [vmem:[%s7 + $0x50] sm:$0xff]
    %v272 = vld [vmem:[%s7 + $0x58] sm:$0xff]
    %v273 = vld [vmem:[%s7 + $0x60] sm:$0xff]
    %v274 = vld [vmem:[%s7 + $0x68] sm:$0xff]
    %v275 = vld [vmem:[%s7 + $0x70] sm:$0xff]
    %v276 = vld [vmem:[%s7 + $0x78] sm:$0xff]
    %v277 = vld [vmem:[%s8] sm:$0x1]
    %v279 = vlaneseq
    %v280 = vshrl.u32 %v279, 7
    %v281 = vsub.s32 0, %v280
    %v282 = vrot.slane %v277, %v281
    %284 = vmatprep.subr.mxu0 0.0
    %285 = vmatpush1.msra.mxu0 %v261
    %286 = vmatprep.subr.mxu0 0.0
    %287 = vmatpush1.msra.mxu0 %v262
    %288 = vmatprep.subr.mxu0 0.0
    %289 = vmatpush1.msra.mxu0 %v263
    %290 = vmatprep.subr.mxu0 0.0
    %291 = vmatpush1.msra.mxu0 %v264
    %292 = vmatprep.subr.mxu0 0.0
    %293 = vmatpush1.msra.mxu0 %v265
    %294 = vmatprep.subr.mxu0 0.0
    %295 = vmatpush1.msra.mxu0 %v266
    %296 = vmatprep.subr.mxu0 0.0
    %297 = vmatpush1.msra.mxu0 %v267
    %298 = vmatprep.subr.mxu0 0.0
    %299 = vmatpush1.msra.mxu0 %v268
    %300 = vmatprep.subr.mxu0 0.0
    %301 = vmatpush1.msra.mxu0 %v269
    %302 = vmatprep.subr.mxu0 0.0
    %303 = vmatpush1.msra.mxu0 %v270
    %304 = vmatprep.subr.mxu0 0.0
    %305 = vmatpush1.msra.mxu0 %v271
    %306 = vmatprep.subr.mxu0 0.0
    %307 = vmatpush1.msra.mxu0 %v272
    %308 = vmatprep.subr.mxu0 0.0
    %309 = vmatpush1.msra.mxu0 %v273
    %310 = vmatprep.subr.mxu0 0.0
    %311 = vmatpush1.msra.mxu0 %v274
    %312 = vmatprep.subr.mxu0 0.0
    %313 = vmatpush1.msra.mxu0 %v275
    %314 = vmatprep.subr.mxu0 0.0
    %315 = vmatpush1.msra.mxu0 %v276
    %316 = vmatprep.subr.mxu0 0.0
    %317 = vmatpush1.msra.mxu0 0.0
    %318 = vmatprep.subr.mxu0 0.0
    %319 = vmatpush1.msra.mxu0 0.0
    %320 = vmatprep.subr.mxu0 0.0
    %321 = vmatpush1.msra.mxu0 0.0
    %322 = vmatprep.subr.mxu0 0.0
    %323 = vmatpush1.msra.mxu0 0.0
    %324 = vmatprep.subr.mxu0 0.0
    %325 = vmatpush1.msra.mxu0 0.0
    %326 = vmatprep.subr.mxu0 0.0
    %327 = vmatpush1.msra.mxu0 0.0
    %328 = vmatprep.subr.mxu0 0.0
    %329 = vmatpush1.msra.mxu0 0.0
    %330 = vmatprep.subr.mxu0 0.0
    %331 = vmatpush1.msra.mxu0 0.0
    %332 = vmatprep.subr.mxu0 0.0
    %333 = vmatpush1.msra.mxu0 0.0
    %334 = vmatprep.subr.mxu0 0.0
    %335 = vmatpush1.msra.mxu0 0.0
    %336 = vmatprep.subr.mxu0 0.0
    %337 = vmatpush1.msra.mxu0 0.0
    %338 = vmatprep.subr.mxu0 0.0
    %339 = vmatpush1.msra.mxu0 0.0
    %340 = vmatprep.subr.mxu0 0.0
    %341 = vmatpush1.msra.mxu0 0.0
    %342 = vmatprep.subr.mxu0 0.0
    %343 = vmatpush1.msra.mxu0 0.0
    %344 = vmatprep.subr.mxu0 0.0
    %345 = vmatpush1.msra.mxu0 0.0
    %346 = vmatprep.subr.mxu0 0.0
    %347 = vmatpush1.msra.mxu0 0.0
    %348 = vmatprep.mubr.f32.mxu0 0.0
    %349 = vmatmul.mubr.f32.gmra.mrb[0].mxu0 %v257
    %v350 = vpop.f32.mrb[0].mxu0
    %v351 = vadd.f32 %v282, %v350
    %v352 = vpop.f32.mrb[0].mxu0
    %353 = vmatprep.mubr.f32.mxu0 0.0
    %354 = vmatmul.mubr.f32.gmra.mrb[0].mxu0 %v258
    %v355 = vpop.f32.mrb[0].mxu0
    %v356 = vadd.f32 %v282, %v355
    %v357 = vpop.f32.mrb[0].mxu0
    %358 = vmatprep.mubr.f32.mxu0 0.0
    %359 = vmatmul.mubr.f32.gmra.mrb[0].mxu0 %v259
    %v360 = vpop.f32.mrb[0].mxu0
    %v361 = vadd.f32 %v282, %v360
    %v362 = vpop.f32.mrb[0].mxu0
    %363 = vmatprep.mubr.f32.mxu0 0.0
    %364 = vmatmul.mubr.f32.gmra.mrb[0].mxu0 %v260
    %v365 = vpop.f32.mrb[0].mxu0
    %v366 = vadd.f32 %v282, %v365
    %v367 = vpop.f32.mrb[0].mxu0
    %368 = vdwg.mxu0
    %v369 = vmul.f32 %v351, 0.5
    %v370 = vmul.f32 %v356, 0.5
    %v371 = vmul.f32 %v361, 0.5
    %v372 = vmul.f32 %v366, 0.5
    %v373 = vmul.f32 %v351, 0.70710677
    %v374 = vmul.f32 %v356, 0.70710677
    %v375 = vmul.f32 %v361, 0.70710677
    %v376 = vmul.f32 %v366, 0.70710677
    %v377 = verf.f32.pop %v373
    %v378 = verf.f32.pop %v374
    %v379 = verf.f32.pop %v375
    %v380 = verf.f32.pop %v376
    %v381 = vadd.f32 %v377, 1.0
    %v382 = vadd.f32 %v378, 1.0
    %v383 = vadd.f32 %v379, 1.0
    %v384 = vadd.f32 %v380, 1.0
    %v385 = vmul.f32 %v369, %v381
    %v386 = vmul.f32 %v370, %v382
    %v387 = vmul.f32 %v371, %v383
    %v388 = vmul.f32 %v372, %v384
    %v389 = vld [vmem:[%s9] sm:$0xff]
    %v390 = vld [vmem:[%s9 + $0x8] sm:$0xff]
    %v391 = vld [vmem:[%s9 + $0x10] sm:$0xff]
    %v392 = vld [vmem:[%s9 + $0x18] sm:$0xff]
    %v393 = vld [vmem:[%s9 + $0x20] sm:$0xff]
    %v394 = vld [vmem:[%s9 + $0x28] sm:$0xff]
    %v395 = vld [vmem:[%s9 + $0x30] sm:$0xff]
    %v396 = vld [vmem:[%s9 + $0x38] sm:$0xff]
    %v397 = vld [vmem:[%s9 + $0x40] sm:$0xff]
    %v398 = vld [vmem:[%s9 + $0x48] sm:$0xff]
    %v399 = vld [vmem:[%s9 + $0x50] sm:$0xff]
    %v400 = vld [vmem:[%s9 + $0x58] sm:$0xff]
    %v401 = vld [vmem:[%s9 + $0x60] sm:$0xff]
    %v402 = vld [vmem:[%s9 + $0x68] sm:$0xff]
    %v403 = vld [vmem:[%s9 + $0x70] sm:$0xff]
    %v404 = vld [vmem:[%s9 + $0x78] sm:$0xff]
    %v405 = vld [vmem:[%s10] sm:$0x1]
    %v407 = vlaneseq
    %v408 = vshrl.u32 %v407, 7
    %v409 = vsub.s32 0, %v408
    %v410 = vrot.slane %v405, %v409
    %412 = vmatprep.subr.mxu0 0.0
    %413 = vmatpush1.msra.mxu0 %v389
    %414 = vmatprep.subr.mxu0 0.0
    %415 = vmatpush1.msra.mxu0 %v390
    %416 = vmatprep.subr.mxu0 0.0
    %417 = vmatpush1.msra.mxu0 %v391
    %418 = vmatprep.subr.mxu0 0.0
    %419 = vmatpush1.msra.mxu0 %v392
    %420 = vmatprep.subr.mxu0 0.0
    %421 = vmatpush1.msra.mxu0 %v393
    %422 = vmatprep.subr.mxu0 0.0
    %423 = vmatpush1.msra.mxu0 %v394
    %424 = vmatprep.subr.mxu0 0.0
    %425 = vmatpush1.msra.mxu0 %v395
    %426 = vmatprep.subr.mxu0 0.0
    %427 = vmatpush1.msra.mxu0 %v396
    %428 = vmatprep.subr.mxu0 0.0
    %429 = vmatpush1.msra.mxu0 %v397
    %430 = vmatprep.subr.mxu0 0.0
    %431 = vmatpush1.msra.mxu0 %v398
    %432 = vmatprep.subr.mxu0 0.0
    %433 = vmatpush1.msra.mxu0 %v399
    %434 = vmatprep.subr.mxu0 0.0
    %435 = vmatpush1.msra.mxu0 %v400
    %436 = vmatprep.subr.mxu0 0.0
    %437 = vmatpush1.msra.mxu0 %v401
    %438 = vmatprep.subr.mxu0 0.0
    %439 = vmatpush1.msra.mxu0 %v402
    %440 = vmatprep.subr.mxu0 0.0
    %441 = vmatpush1.msra.mxu0 %v403
    %442 = vmatprep.subr.mxu0 0.0
    %443 = vmatpush1.msra.mxu0 %v404
    %444 = vmatprep.subr.mxu0 0.0
    %445 = vmatpush1.msra.mxu0 0.0
    %446 = vmatprep.subr.mxu0 0.0
    %447 = vmatpush1.msra.mxu0 0.0
    %448 = vmatprep.subr.mxu0 0.0
    %449 = vmatpush1.msra.mxu0 0.0
    %450 = vmatprep.subr.mxu0 0.0
    %451 = vmatpush1.msra.mxu0 0.0
    %452 = vmatprep.subr.mxu0 0.0
    %453 = vmatpush1.msra.mxu0 0.0
    %454 = vmatprep.subr.mxu0 0.0
    %455 = vmatpush1.msra.mxu0 0.0
    %456 = vmatprep.subr.mxu0 0.0
    %457 = vmatpush1.msra.mxu0 0.0
    %458 = vmatprep.subr.mxu0 0.0
    %459 = vmatpush1.msra.mxu0 0.0
    %460 = vmatprep.subr.mxu0 0.0
    %461 = vmatpush1.msra.mxu0 0.0
    %462 = vmatprep.subr.mxu0 0.0
    %463 = vmatpush1.msra.mxu0 0.0
    %464 = vmatprep.subr.mxu0 0.0
    %465 = vmatpush1.msra.mxu0 0.0
    %466 = vmatprep.subr.mxu0 0.0
    %467 = vmatpush1.msra.mxu0 0.0
    %468 = vmatprep.subr.mxu0 0.0
    %469 = vmatpush1.msra.mxu0 0.0
    %470 = vmatprep.subr.mxu0 0.0
    %471 = vmatpush1.msra.mxu0 0.0
    %472 = vmatprep.subr.mxu0 0.0
    %473 = vmatpush1.msra.mxu0 0.0
    %474 = vmatprep.subr.mxu0 0.0
    %475 = vmatpush1.msra.mxu0 0.0
    %476 = vmatprep.mubr.f32.mxu0 0.0
    %477 = vmatmul.mubr.f32.gmra.mrb[0].mxu0 %v385
    %v478 = vpop.f32.mrb[0].mxu0
    %v479 = vadd.f32 %v410, %v478
    %v480 = vpop.f32.mrb[0].mxu0
    %481 = vmatprep.mubr.f32.mxu0 0.0
    %482 = vmatmul.mubr.f32.gmra.mrb[0].mxu0 %v386
    %v483 = vpop.f32.mrb[0].mxu0
    %v484 = vadd.f32 %v410, %v483
    %v485 = vpop.f32.mrb[0].mxu0
    %486 = vmatprep.mubr.f32.mxu0 0.0
    %487 = vmatmul.mubr.f32.gmra.mrb[0].mxu0 %v387
    %v488 = vpop.f32.mrb[0].mxu0
    %v489 = vadd.f32 %v410, %v488
    %v490 = vpop.f32.mrb[0].mxu0
    %491 = vmatprep.mubr.f32.mxu0 0.0
    %492 = vmatmul.mubr.f32.gmra.mrb[0].mxu0 %v388
    %v493 = vpop.f32.mrb[0].mxu0
    %v494 = vadd.f32 %v410, %v493
    %v495 = vpop.f32.mrb[0].mxu0
    %496 = vdwg.mxu0
    %497 = vst [vmem:[#allocation2] sm:$0xff] %v479
    %498 = vst [vmem:[#allocation2 + $0x8] sm:$0xff] %v484
    %499 = vst [vmem:[#allocation2 + $0x10] sm:$0xff] %v489
    %500 = vst [vmem:[#allocation2 + $0x18] sm:$0xff] %v494
    // Predicated region
    $region46: #{ssast_forward.1} parent=1 // pred_check
      _
    $region47: #{ssast_forward.1} parent=1 // pred_check_branch
      %502 = sbr.rel (0) target = $region49
    $region48: #{ssast_forward.1} parent=1 // pred_region
      %s504 = ssub.s32 512, 512
      %505 = vsyncadd [#allocation3], %s504
      %s506 = sshll.u32 [#allocation2], 4
      %s507 = int_to_ptr.vmem [resolvable:$true] %s506
      %512 = dma.vmem_to_hbm [thread:$0]  %s507, 512, %s11, [#allocation3], 128, 128, 8
    $region49: #{ssast_forward.1} parent=1 // pred_fallthru
      _
    // Predicated region
    $region50: #{ssast_forward.1} parent=1 // pred_check
      _
    $region51: #{ssast_forward.1} parent=1 // pred_check_branch
      %514 = sbr.rel (0) target = $region53
    $region52: #{ssast_forward.1} parent=1 // pred_region
      %515 = dma.done [#allocation3], 512
    $region53: #{ssast_forward.1} parent=1 // pred_fallthru
      _
    %516 = vsyncpa [#allocation3], 1

</llo_original>
